<compile_context>
chip_gen: v7x
topology: tpu7x:2x2x1
jax: 0.10.0
libtpu: 0.0.40
codegen_flags: <defaults>
</compile_context>

<pallas_src>
import functools

import jax
import jax.numpy as jnp
from jax.experimental import pallas as pl
from jax.experimental.pallas import tpu as pltpu

HIDDEN = 64        # logical hidden width (as in the PyTorch module)
HIDDEN_PAD = 128   # lane-dense hidden width used inside the kernel
OUT_PAD = 128      # lane-dense width of the padded third-layer weights


def _round_up(x, m):
    return (x + m - 1) // m * m


def _loss_nn_kernel(x_ref, w1_ref, b1_ref, w2_ref, b2_ref, w3_ref, b3_ref,
                    o_ref, *, dot_dtype):
    """Fused padded-MLP forward for one batch tile.

    Matmuls accumulate in f32 on the MXU; bias add + ReLU stay f32 (native on
    all generations, incl. v5e which has no bf16 VPU).  Only the logical
    out_dim lanes are stored (o_ref is (tb, out_dim)).
    """
    # obs arrives f32; cast for the MXU feed in-kernel (hidden under obs DMA).
    x = x_ref[...].astype(dot_dtype)                           # (TB, in_dim)

    h1 = jnp.dot(x, w1_ref[...], preferred_element_type=jnp.float32)
    h1 = jnp.maximum(h1 + b1_ref[...], 0.0).astype(dot_dtype)  # (TB, 128)

    h2 = jnp.dot(h1, w2_ref[...], preferred_element_type=jnp.float32)
    h2 = jnp.maximum(h2 + b2_ref[...], 0.0).astype(dot_dtype)  # (TB, 128)

    out = jnp.dot(h2, w3_ref[...], preferred_element_type=jnp.float32)
    out = out + b3_ref[...]                                     # (TB, 128) f32
    o_ref[...] = out[:, :o_ref.shape[1]].astype(o_ref.dtype)    # (TB, out_dim)


def loss_nn_forward(obs, params, *, block_b=1024, use_bf16=True,
                    min_kernel_batch=256):
    """Run LossNN forward on observations.

    obs:    (B, in_dim) float32, or (in_dim,) for the 'testing'-mode path.
    params: dict from init_loss_nn_params (lane-padded weights, "out_dim" int).
    block_b: target batch tile size (tiles are balanced and rounded to a
             multiple of 8; at least 2 tiles are produced when B > 8).
    use_bf16: feed bf16 operands to the MXU with f32 accumulation (production
             default; use_bf16=False is test-only).
    min_kernel_batch: below this batch size fall back to plain XLA (the
             pallas_call dispatch overhead dominates for tiny problems); the
             fallback uses the same numerics (honors use_bf16).
    """
    out_dim = int(params["out_dim"])

    squeeze = (obs.ndim == 1)
    if squeeze:
        obs = obs[None, :]
    B, in_dim = obs.shape

    if B < min_kernel_batch:
        out = reference_forward(obs, params, use_bf16=use_bf16)
        return out[0] if squeeze else out

    # Balanced batch tiles, >= 2 of them (v7x megacore + pipeline overlap),
    # each a multiple of 8 sublanes; padding waste is < 8 rows per tile.
    n_tiles = max(2, -(-B // block_b))
    tb = _round_up(max(8, -(-B // n_tiles)), 8)
    b_pad = tb * (-(-B // tb))

    x = obs.astype(jnp.float32)
    if b_pad != B:
        x = jnp.pad(x, ((0, b_pad - B), (0, 0)))  # tail rows sliced off below

    w1, w2, w3 = params["w1t"], params["w2t"], params["w3t"]
    b1, b2, b3 = params["b1"], params["b2"], params["b3"]
    dot_dtype = jnp.bfloat16 if use_bf16 else jnp.float32
    if use_bf16:
        w1 = w1.astype(jnp.bfloat16)
        w2 = w2.astype(jnp.bfloat16)
        w3 = w3.astype(jnp.bfloat16)

    grid = (b_pad // tb,)

    w_itemsize = 2 if use_bf16 else 4
    flops = 2 * b_pad * (in_dim * HIDDEN_PAD
                         + HIDDEN_PAD * HIDDEN_PAD
                         + HIDDEN_PAD * OUT_PAD)
    bytes_accessed = (b_pad * in_dim * 4                              # obs f32
                      + (in_dim * HIDDEN_PAD + HIDDEN_PAD * HIDDEN_PAD
                         + HIDDEN_PAD * OUT_PAD) * w_itemsize         # weights
                      + (2 * HIDDEN_PAD + OUT_PAD) * 4                # biases
                      + b_pad * out_dim * 4)                          # output
    cost = pl.CostEstimate(flops=flops, transcendentals=0,
                           bytes_accessed=bytes_accessed)

    kernel = functools.partial(_loss_nn_kernel, dot_dtype=dot_dtype)

    out_full = pl.pallas_call(
        kernel,
        out_shape=jax.ShapeDtypeStruct((b_pad, out_dim), jnp.float32),
        grid=grid,
        in_specs=[
            # obs: tiled over the batch axis (f32; cast happens in-kernel).
            pl.BlockSpec((tb, in_dim), lambda i: (i, 0)),
            # Weights / biases: constant index_map -> stay resident in VMEM.
            pl.BlockSpec((in_dim, HIDDEN_PAD), lambda i: (0, 0)),
            pl.BlockSpec((1, HIDDEN_PAD), lambda i: (0, 0)),
            pl.BlockSpec((HIDDEN_PAD, HIDDEN_PAD), lambda i: (0, 0)),
            pl.BlockSpec((1, HIDDEN_PAD), lambda i: (0, 0)),
            pl.BlockSpec((HIDDEN_PAD, OUT_PAD), lambda i: (0, 0)),
            pl.BlockSpec((1, OUT_PAD), lambda i: (0, 0)),
        ],
        # Last block dim == full array dim (out_dim), so <128 lanes is legal;
        # only the useful out_dim lanes ever touch HBM.
        out_specs=pl.BlockSpec((tb, out_dim), lambda i: (i, 0)),
        compiler_params=pltpu.CompilerParams(
            dimension_semantics=("parallel",)),
        cost_estimate=cost,
    )(x, w1, b1, w2, b2, w3, b3)

    out = out_full[:B] if b_pad != B else out_full
    return out[0] if squeeze else out


def init_loss_nn_params(key, in_dim, out_dim):
    """nn.Linear-style init U(-1/sqrt(fan_in), +), stored transposed and
    zero-padded to lane-dense (128-wide) shapes.  Padded rows/cols are zero,
    so the padded network is exactly equivalent to the logical one."""
    def linear(k, fan_in, fan_out, fan_in_pad, fan_out_pad):
        kw, kb = jax.random.split(k)
        bound = 1.0 / jnp.sqrt(jnp.float32(fan_in))
        w_t = jax.random.uniform(kw, (fan_in, fan_out), jnp.float32,
                                 -bound, bound)
        b = jax.random.uniform(kb, (1, fan_out), jnp.float32, -bound, bound)
        w_pad = jnp.zeros((fan_in_pad, fan_out_pad), jnp.float32)
        w_pad = w_pad.at[:fan_in, :fan_out].set(w_t)
        b_pad = jnp.zeros((1, fan_out_pad), jnp.float32)
        b_pad = b_pad.at[:, :fan_out].set(b)
        return w_pad, b_pad

    k1, k2, k3 = jax.random.split(key, 3)
    w1t, b1 = linear(k1, in_dim, HIDDEN, in_dim, HIDDEN_PAD)
    w2t, b2 = linear(k2, HIDDEN, HIDDEN, HIDDEN_PAD, HIDDEN_PAD)
    w3t, b3 = linear(k3, HIDDEN, out_dim, HIDDEN_PAD, OUT_PAD)
    return {"w1t": w1t, "b1": b1, "w2t": w2t, "b2": b2,
            "w3t": w3t, "b3": b3, "out_dim": out_dim}


def reference_forward(obs, params, *, use_bf16=False):
    """Pure-JAX reference (same padded params; mirrors kernel numerics when
    use_bf16=True: bf16 MXU operands, f32 accumulation, f32 bias/ReLU)."""
    out_dim = int(params["out_dim"])
    dt = jnp.bfloat16 if use_bf16 else jnp.float32
    x = obs.astype(jnp.float32)
    h1 = jnp.dot(x.astype(dt), params["w1t"].astype(dt),
                 preferred_element_type=jnp.float32) + params["b1"]
    h1 = jnp.maximum(h1, 0.0)
    h2 = jnp.dot(h1.astype(dt), params["w2t"].astype(dt),
                 preferred_element_type=jnp.float32) + params["b2"]
    h2 = jnp.maximum(h2, 0.0)
    out = jnp.dot(h2.astype(dt), params["w3t"].astype(dt),
                  preferred_element_type=jnp.float32) + params["b3"]
    return out[..., :out_dim]


if __name__ == "__main__":
    in_dim, out_dim = 32, 8

    key = jax.random.PRNGKey(0)
    k_params, k_obs1, k_obs2 = jax.random.split(key, 3)
    params = init_loss_nn_params(k_params, in_dim, out_dim)

    # 1) f32 path, batch divisible by the tile -> exercises the batch grid
    #    (4 grid steps), tight tolerance vs. reference.
    obs = jax.random.normal(k_obs1, (64, in_dim), jnp.float32)
    out = jax.block_until_ready(
        loss_nn_forward(obs, params, block_b=16, use_bf16=False,
                        min_kernel_batch=0))
    ref = reference_forward(obs, params, use_bf16=False)
    assert out.shape == (64, out_dim)
    assert jnp.allclose(out, ref, atol=1e-5, rtol=1e-5), "f32 mismatch"

    # 2) bf16 matmul operands + ragged batch (tail padding, 2 balanced tiles),
    #    loose tolerance vs. f32 reference.
    obs2 = jax.random.normal(k_obs2, (20, in_dim), jnp.float32)
    out2 = jax.block_until_ready(
        loss_nn_forward(obs2, params, block_b=16, use_bf16=True,
                        min_kernel_batch=0))
    ref2_f32 = reference_forward(obs2, params, use_bf16=False)
    ref2_bf16 = reference_forward(obs2, params, use_bf16=True)
    assert out2.shape == (20, out_dim)
    assert jnp.allclose(out2, ref2_f32, atol=5e-2, rtol=5e-2), "bf16 mismatch"
    # Kernel numerics should match the bf16 fallback path closely.
    assert jnp.allclose(out2, ref2_bf16, atol=5e-3, rtol=5e-3), \
        "bf16 kernel/fallback mismatch"

    # 3) 1-D obs ('testing'-mode flatten semantics).
    obs3 = obs2[0]
    out3 = jax.block_until_ready(
        loss_nn_forward(obs3, params, use_bf16=False, min_kernel_batch=0))
    assert out3.shape == (out_dim,)
    assert jnp.allclose(out3, ref2_f32[0], atol=1e-5, rtol=1e-5), "1-D mismatch"

    print("KERNEL_OK")
</pallas_src>

<mosaic_0001>
module attributes {stable_mosaic.version = 11 : i64} {
  func.func @_loss_nn_kernel(%arg0: i32, %arg1: memref<16x32xf32, #tpu.memory_space<vmem>>, %arg2: memref<32x128xf32, #tpu.memory_space<vmem>>, %arg3: memref<1x128xf32, #tpu.memory_space<vmem>>, %arg4: memref<128x128xf32, #tpu.memory_space<vmem>>, %arg5: memref<1x128xf32, #tpu.memory_space<vmem>>, %arg6: memref<128x128xf32, #tpu.memory_space<vmem>>, %arg7: memref<1x128xf32, #tpu.memory_space<vmem>>, %arg8: memref<16x8xf32, #tpu.memory_space<vmem>>) attributes {dimension_semantics = [#tpu.dimension_semantics<parallel>], iteration_bounds = array<i64: 4>, scalar_prefetch = 0 : i64, scratch_operands = 0 : i64, tpu.core_type = #tpu.core_type<tc>, window_params = [{transform_indices = @transform_0, window_bounds = array<i64: 16, 32>}, {pipeline_mode = #tpu.pipeline_mode<synchronous>, transform_indices = @transform_1, window_bounds = array<i64: 32, 128>}, {pipeline_mode = #tpu.pipeline_mode<synchronous>, transform_indices = @transform_2, window_bounds = array<i64: 1, 128>}, {pipeline_mode = #tpu.pipeline_mode<synchronous>, transform_indices = @transform_3, window_bounds = array<i64: 128, 128>}, {pipeline_mode = #tpu.pipeline_mode<synchronous>, transform_indices = @transform_4, window_bounds = array<i64: 1, 128>}, {pipeline_mode = #tpu.pipeline_mode<synchronous>, transform_indices = @transform_5, window_bounds = array<i64: 128, 128>}, {pipeline_mode = #tpu.pipeline_mode<synchronous>, transform_indices = @transform_6, window_bounds = array<i64: 1, 128>}, {transform_indices = @transform_7, window_bounds = array<i64: 16, 8>}]} {
    %c0 = arith.constant 0 : index
    %c0_0 = arith.constant 0 : index
    %0 = vector.load %arg1[%c0, %c0_0] : memref<16x32xf32, #tpu.memory_space<vmem>>, vector<16x32xf32>
    %c0_1 = arith.constant 0 : index
    %c0_2 = arith.constant 0 : index
    %1 = vector.load %arg2[%c0_1, %c0_2] : memref<32x128xf32, #tpu.memory_space<vmem>>, vector<32x128xf32>
    %cst = arith.constant dense<0.000000e+00> : vector<16x128xf32>
    %2 = tpu.matmul %0, %1, %cst {dimension_numbers = #tpu.dot_dimension_numbers<[1], [0], [0], [1], [0, 0, 1, 1], [], []>} : vector<16x32xf32>, vector<32x128xf32>, vector<16x128xf32> -> vector<16x128xf32>
    %c0_3 = arith.constant 0 : index
    %c0_4 = arith.constant 0 : index
    %3 = vector.load %arg3[%c0_3, %c0_4] : memref<1x128xf32, #tpu.memory_space<vmem>>, vector<1x128xf32>
    %4 = vector.broadcast %3 : vector<1x128xf32> to vector<16x128xf32>
    %5 = arith.addf %2, %4 : vector<16x128xf32>
    %cst_5 = arith.constant 0.000000e+00 : f32
    %6 = vector.broadcast %cst_5 : f32 to vector<16x128xf32>
    %7 = arith.maximumf %5, %6 : vector<16x128xf32>
    %c0_6 = arith.constant 0 : index
    %c0_7 = arith.constant 0 : index
    %8 = vector.load %arg4[%c0_6, %c0_7] : memref<128x128xf32, #tpu.memory_space<vmem>>, vector<128x128xf32>
    %cst_8 = arith.constant dense<0.000000e+00> : vector<16x128xf32>
    %9 = tpu.matmul %7, %8, %cst_8 {dimension_numbers = #tpu.dot_dimension_numbers<[1], [0], [0], [1], [0, 0, 1, 1], [], []>} : vector<16x128xf32>, vector<128x128xf32>, vector<16x128xf32> -> vector<16x128xf32>
    %c0_9 = arith.constant 0 : index
    %c0_10 = arith.constant 0 : index
    %10 = vector.load %arg5[%c0_9, %c0_10] : memref<1x128xf32, #tpu.memory_space<vmem>>, vector<1x128xf32>
    %11 = vector.broadcast %10 : vector<1x128xf32> to vector<16x128xf32>
    %12 = arith.addf %9, %11 : vector<16x128xf32>
    %cst_11 = arith.constant 0.000000e+00 : f32
    %13 = vector.broadcast %cst_11 : f32 to vector<16x128xf32>
    %14 = arith.maximumf %12, %13 : vector<16x128xf32>
    %c0_12 = arith.constant 0 : index
    %c0_13 = arith.constant 0 : index
    %15 = vector.load %arg6[%c0_12, %c0_13] : memref<128x128xf32, #tpu.memory_space<vmem>>, vector<128x128xf32>
    %cst_14 = arith.constant dense<0.000000e+00> : vector<16x128xf32>
    %16 = tpu.matmul %14, %15, %cst_14 {dimension_numbers = #tpu.dot_dimension_numbers<[1], [0], [0], [1], [0, 0, 1, 1], [], []>} : vector<16x128xf32>, vector<128x128xf32>, vector<16x128xf32> -> vector<16x128xf32>
    %c0_15 = arith.constant 0 : index
    %c0_16 = arith.constant 0 : index
    %17 = vector.load %arg7[%c0_15, %c0_16] : memref<1x128xf32, #tpu.memory_space<vmem>>, vector<1x128xf32>
    %18 = vector.broadcast %17 : vector<1x128xf32> to vector<16x128xf32>
    %19 = arith.addf %16, %18 : vector<16x128xf32>
    %20 = vector.extract_strided_slice %19 {offsets = [0, 0], sizes = [16, 8], strides = [1, 1]} : vector<16x128xf32> to vector<16x8xf32>
    %c0_17 = arith.constant 0 : index
    %c0_18 = arith.constant 0 : index
    %21 = vector.load %arg8[%c0_17, %c0_18] : memref<16x8xf32, #tpu.memory_space<vmem>>, vector<16x8xf32>
    tpu.vector_store %arg8[%c0_17, %c0_18], %20 {strides = array<i32>} : memref<16x8xf32, #tpu.memory_space<vmem>>, vector<16x8xf32>,
    return
  }
  func.func @transform_0(%arg0: i32) -> (i32, i32) {
    %c0_i32 = arith.constant 0 : i32
    %c0_i32_0 = arith.constant 0 : i32
    return %arg0, %c0_i32 : i32, i32
  }
  func.func @transform_1(%arg0: i32) -> (i32, i32) {
    %c0_i32 = arith.constant 0 : i32
    %c0_i32_0 = arith.constant 0 : i32
    %c0_i32_1 = arith.constant 0 : i32
    return %c0_i32, %c0_i32_0 : i32, i32
  }
  func.func @transform_2(%arg0: i32) -> (i32, i32) {
    %c0_i32 = arith.constant 0 : i32
    %c0_i32_0 = arith.constant 0 : i32
    %c0_i32_1 = arith.constant 0 : i32
    return %c0_i32, %c0_i32_0 : i32, i32
  }
  func.func @transform_3(%arg0: i32) -> (i32, i32) {
    %c0_i32 = arith.constant 0 : i32
    %c0_i32_0 = arith.constant 0 : i32
    %c0_i32_1 = arith.constant 0 : i32
    return %c0_i32, %c0_i32_0 : i32, i32
  }
  func.func @transform_4(%arg0: i32) -> (i32, i32) {
    %c0_i32 = arith.constant 0 : i32
    %c0_i32_0 = arith.constant 0 : i32
    %c0_i32_1 = arith.constant 0 : i32
    return %c0_i32, %c0_i32_0 : i32, i32
  }
  func.func @transform_5(%arg0: i32) -> (i32, i32) {
    %c0_i32 = arith.constant 0 : i32
    %c0_i32_0 = arith.constant 0 : i32
    %c0_i32_1 = arith.constant 0 : i32
    return %c0_i32, %c0_i32_0 : i32, i32
  }
  func.func @transform_6(%arg0: i32) -> (i32, i32) {
    %c0_i32 = arith.constant 0 : i32
    %c0_i32_0 = arith.constant 0 : i32
    %c0_i32_1 = arith.constant 0 : i32
    return %c0_i32, %c0_i32_0 : i32, i32
  }
  func.func @transform_7(%arg0: i32) -> (i32, i32) {
    %c0_i32 = arith.constant 0 : i32
    %c0_i32_0 = arith.constant 0 : i32
    return %arg0, %c0_i32 : i32, i32
  }
}

</mosaic_0001>

<llo_original>
// kernel: tpu_custom_call.1
$region0: #{tpu_custom_call.1}
  #allocation0 [shape = 'u32[]', space=smem, size = 0x4, offset = 0x4, fixed_abs, tag = 'smem constant byte address 0x4 - core index']
  #allocation1 [shape = 'u32[144,128]{1,0:T(1,128)}', space=vmem, size = 0x12000, scoped, tag = 'internal scratch']
  %s0 = inlined_call_operand.vmem [shape: f32[64,32], index: 0, kind: input, shape index: {}]
  %s1 = inlined_call_operand.vmem [shape: f32[32,128], index: 1, kind: input, shape index: {}]
  %s2 = inlined_call_operand.vmem [shape: f32[1,128], index: 2, kind: input, shape index: {}]
  %s3 = inlined_call_operand.hbm [shape: f32[128,128], index: 3, kind: input, shape index: {}]
  %s4 = inlined_call_operand.vmem [shape: f32[1,128], index: 4, kind: input, shape index: {}]
  %s5 = inlined_call_operand.hbm [shape: f32[128,128], index: 5, kind: input, shape index: {}]
  %s6 = inlined_call_operand.vmem [shape: f32[1,128], index: 6, kind: input, shape index: {}]
  %s7 = inlined_call_operand.vmem [shape: f32[64,8], index: 7, kind: output, shape index: {}]
  %s8 = sld [smem:[#allocation0]]
  $region69: #{tpu_custom_call.1} parent=0
    _
  %s10 = ssub.s32 1, %s8
  %s11 = scalar_select 0, %s10, %s8
  $region1: #{tpu_custom_call.1} parent=0
    #allocation2 [shape = 'u8[65536]{0}', space=vmem, size = 0x10000, scoped, tag = 'input window, operand 3, single buffered']
    #allocation3 [shape = 's32[2]{0}', space=sflag, size = 0x8, scoped, tag = 'scoped memory for tpu_custom_call.1']
    #allocation4 [shape = 'u8[65536]{0}', space=vmem, size = 0x10000, scoped, tag = 'input window, operand 5, single buffered']
    #allocation5 [shape = 's32[1]{0}', space=sflag, size = 0x4, scoped, tag = 'scoped memory for tpu_custom_call.1']
    %12 = vsyncpa [#allocation3], 0
    %13 = vsyncpa [#allocation5], 0
    loop: start=0, step=1, limit=6
    $region2: #{tpu_custom_call.1} parent=1 // loop_pre_header
      _
    $region3: #{tpu_custom_call.1} parent=1 // loop_header
      %s15 = sphi 0, %s19
      %p16 = scmp.ge.s32.totalorder %s15, 6
      %s25 = sphi 0, %s27
      %s28 = sphi 0, %s25
      %s29 = sphi 0, %s28
      %s45 = sphi 0, %s29
      %s49 = sphi 0, %s49
      %s51 = sphi 0, %s49
      %s52 = sphi 0, %s51
      %s66 = sphi 0, %s52
      %s70 = sphi 0, %s70
      %s72 = sphi 0, %s70
      %s73 = sphi 0, %s72
      %s87 = sphi 0, %s73
      %s91 = sphi 0, %s91
      %s93 = sphi 0, %s91
      %s94 = sphi 0, %s93
      %s108 = sphi 0, %s94
      %s112 = sphi 0, %s112
      %s114 = sphi 0, %s112
      %s115 = sphi 0, %s114
      %s129 = sphi 0, %s115
      %s133 = sphi 0, %s133
      %s135 = sphi 0, %s133
      %s136 = sphi 0, %s135
      %s150 = sphi 0, %s136
      %s154 = sphi 0, %s154
      %s156 = sphi 0, %s154
      %s157 = sphi 0, %s156
      %s171 = sphi 0, %s157
      %s177 = sphi 0, %s179
      %s180 = sphi 0, %s177
      %s181 = sphi 0, %s180
      %s197 = sphi 0, %s181
    $region4: #{tpu_custom_call.1} parent=1 // loop_header_branch
      %18 = sbr.rel (%p16) target = $region8
    $region5: #{tpu_custom_call.1} parent=1 // loop_body
      %s20 = ssub.s32 %s15, 1
      %s21 = ssub.s32 %s15, 2
      %s22 = sadd.s32 %s15, 1
      %s23 = ssub.s32 %s15, %s22
      %p24 = scmp.eq.s32.totalorder %s23, 0
      %s26 = sadd.s32 %s25, 1
      %s27 = scalar_select %p24, %s25, %s26
      %p30 = pneg %p24
      %p31 = scmp.eq.s32.totalorder %s15, 3
      %p32 = por %p30, %p31
      %p33 = scmp.ne.s32.totalorder %s25, %s28
      %p34 = scmp.eq.s32.totalorder %s15, 0
      %p35 = por %p33, %p34
      %p36 = scmp.ne.s32.totalorder %s25, %s28
      %p37 = scmp.eq.s32.totalorder %s20, 3
      %p38 = por %p36, %p37
      %p39 = scmp.ne.s32.totalorder %s28, %s29
      %p40 = scmp.eq.s32.totalorder %s20, 0
      %p41 = por %p39, %p40
      %p42 = scmp.ne.s32.totalorder %s28, %s29
      %p43 = scmp.eq.s32.totalorder %s21, 3
      %p44 = por %p42, %p43
      %p46 = scmp.ne.s32.totalorder %s29, %s45
      %p47 = scmp.eq.s32.totalorder %s21, 0
      %p48 = por %p46, %p47
      %s50 = sadd.s32 %s49, 1
      %p53 = scmp.eq.s32.totalorder %s15, 3
      %p54 = scmp.ne.s32.totalorder %s49, %s51
      %p55 = scmp.eq.s32.totalorder %s15, 0
      %p56 = por %p54, %p55
      %p57 = scmp.ne.s32.totalorder %s49, %s51
      %p58 = scmp.eq.s32.totalorder %s20, 3
      %p59 = por %p57, %p58
      %p60 = scmp.ne.s32.totalorder %s51, %s52
      %p61 = scmp.eq.s32.totalorder %s20, 0
      %p62 = por %p60, %p61
      %p63 = scmp.ne.s32.totalorder %s51, %s52
      %p64 = scmp.eq.s32.totalorder %s21, 3
      %p65 = por %p63, %p64
      %p67 = scmp.ne.s32.totalorder %s52, %s66
      %p68 = scmp.eq.s32.totalorder %s21, 0
      %p69 = por %p67, %p68
      %s71 = sadd.s32 %s70, 1
      %p74 = scmp.eq.s32.totalorder %s15, 3
      %p75 = scmp.ne.s32.totalorder %s70, %s72
      %p76 = scmp.eq.s32.totalorder %s15, 0
      %p77 = por %p75, %p76
      %p78 = scmp.ne.s32.totalorder %s70, %s72
      %p79 = scmp.eq.s32.totalorder %s20, 3
      %p80 = por %p78, %p79
      %p81 = scmp.ne.s32.totalorder %s72, %s73
      %p82 = scmp.eq.s32.totalorder %s20, 0
      %p83 = por %p81, %p82
      %p84 = scmp.ne.s32.totalorder %s72, %s73
      %p85 = scmp.eq.s32.totalorder %s21, 3
      %p86 = por %p84, %p85
      %p88 = scmp.ne.s32.totalorder %s73, %s87
      %p89 = scmp.eq.s32.totalorder %s21, 0
      %p90 = por %p88, %p89
      %s92 = sadd.s32 %s91, 1
      %p95 = scmp.eq.s32.totalorder %s15, 3
      %p96 = scmp.ne.s32.totalorder %s91, %s93
      %p97 = scmp.eq.s32.totalorder %s15, 0
      %p98 = por %p96, %p97
      %p99 = scmp.ne.s32.totalorder %s91, %s93
      %p100 = scmp.eq.s32.totalorder %s20, 3
      %p101 = por %p99, %p100
      %p102 = scmp.ne.s32.totalorder %s93, %s94
      %p103 = scmp.eq.s32.totalorder %s20, 0
      %p104 = por %p102, %p103
      %p105 = scmp.ne.s32.totalorder %s93, %s94
      %p106 = scmp.eq.s32.totalorder %s21, 3
      %p107 = por %p105, %p106
      %p109 = scmp.ne.s32.totalorder %s94, %s108
      %p110 = scmp.eq.s32.totalorder %s21, 0
      %p111 = por %p109, %p110
      %s113 = sadd.s32 %s112, 1
      %p116 = scmp.eq.s32.totalorder %s15, 3
      %p117 = scmp.ne.s32.totalorder %s112, %s114
      %p118 = scmp.eq.s32.totalorder %s15, 0
      %p119 = por %p117, %p118
      %p120 = scmp.ne.s32.totalorder %s112, %s114
      %p121 = scmp.eq.s32.totalorder %s20, 3
      %p122 = por %p120, %p121
      %p123 = scmp.ne.s32.totalorder %s114, %s115
      %p124 = scmp.eq.s32.totalorder %s20, 0
      %p125 = por %p123, %p124
      %p126 = scmp.ne.s32.totalorder %s114, %s115
      %p127 = scmp.eq.s32.totalorder %s21, 3
      %p128 = por %p126, %p127
      %p130 = scmp.ne.s32.totalorder %s115, %s129
      %p131 = scmp.eq.s32.totalorder %s21, 0
      %p132 = por %p130, %p131
      %s134 = sadd.s32 %s133, 1
      %p137 = scmp.eq.s32.totalorder %s15, 3
      %p138 = scmp.ne.s32.totalorder %s133, %s135
      %p139 = scmp.eq.s32.totalorder %s15, 0
      %p140 = por %p138, %p139
      %p141 = scmp.ne.s32.totalorder %s133, %s135
      %p142 = scmp.eq.s32.totalorder %s20, 3
      %p143 = por %p141, %p142
      %p144 = scmp.ne.s32.totalorder %s135, %s136
      %p145 = scmp.eq.s32.totalorder %s20, 0
      %p146 = por %p144, %p145
      %p147 = scmp.ne.s32.totalorder %s135, %s136
      %p148 = scmp.eq.s32.totalorder %s21, 3
      %p149 = por %p147, %p148
      %p151 = scmp.ne.s32.totalorder %s136, %s150
      %p152 = scmp.eq.s32.totalorder %s21, 0
      %p153 = por %p151, %p152
      %s155 = sadd.s32 %s154, 1
      %p158 = scmp.eq.s32.totalorder %s15, 3
      %p159 = scmp.ne.s32.totalorder %s154, %s156
      %p160 = scmp.eq.s32.totalorder %s15, 0
      %p161 = por %p159, %p160
      %p162 = scmp.ne.s32.totalorder %s154, %s156
      %p163 = scmp.eq.s32.totalorder %s20, 3
      %p164 = por %p162, %p163
      %p165 = scmp.ne.s32.totalorder %s156, %s157
      %p166 = scmp.eq.s32.totalorder %s20, 0
      %p167 = por %p165, %p166
      %p168 = scmp.ne.s32.totalorder %s156, %s157
      %p169 = scmp.eq.s32.totalorder %s21, 3
      %p170 = por %p168, %p169
      %p172 = scmp.ne.s32.totalorder %s157, %s171
      %p173 = scmp.eq.s32.totalorder %s21, 0
      %p174 = por %p172, %p173
      %s175 = ssub.s32 %s15, %s22
      %p176 = scmp.eq.s32.totalorder %s175, 0
      %s178 = sadd.s32 %s177, 1
      %s179 = scalar_select %p176, %s177, %s178
      %p182 = pneg %p176
      %p183 = scmp.eq.s32.totalorder %s15, 3
      %p184 = por %p182, %p183
      %p185 = scmp.ne.s32.totalorder %s177, %s180
      %p186 = scmp.eq.s32.totalorder %s15, 0
      %p187 = por %p185, %p186
      %p188 = scmp.ne.s32.totalorder %s177, %s180
      %p189 = scmp.eq.s32.totalorder %s20, 3
      %p190 = por %p188, %p189
      %p191 = scmp.ne.s32.totalorder %s180, %s181
      %p192 = scmp.eq.s32.totalorder %s20, 0
      %p193 = por %p191, %p192
      %p194 = scmp.ne.s32.totalorder %s180, %s181
      %p195 = scmp.eq.s32.totalorder %s21, 3
      %p196 = por %p194, %p195
      %p198 = scmp.ne.s32.totalorder %s181, %s197
      %p199 = scmp.eq.s32.totalorder %s21, 0
      %p200 = por %p198, %p199
      %p201 = scmp.le.s32.totalorder 1, %s15
      %p202 = scmp.lt.s32.totalorder %s15, 5
      %p203 = pnand %p201, %p202
      %p204 = pneg %p203
      // Predicated region
      $region9: #{tpu_custom_call.1} parent=5 // pred_check
        _
      $region10: #{tpu_custom_call.1} parent=5 // pred_check_branch
        %206 = sbr.rel (%p203) target = $region12
      $region11: #{tpu_custom_call.1} parent=5 // pred_region
        %s207 = ssub.s32 %s15, 1
        // Predicated region
        $region13: #{tpu_custom_call.1} parent=11 // pred_check
          %p208 = pneg %p62
        $region14: #{tpu_custom_call.1} parent=11 // pred_check_branch
          %210 = sbr.rel (%p208) target = $region16
        $region15: #{tpu_custom_call.1} parent=11 // pred_region
          _
        $region16: #{tpu_custom_call.1} parent=11 // pred_fallthru
          _
        // Predicated region
        $region17: #{tpu_custom_call.1} parent=11 // pred_check
          %p211 = pneg %p83
        $region18: #{tpu_custom_call.1} parent=11 // pred_check_branch
          %213 = sbr.rel (%p211) target = $region20
        $region19: #{tpu_custom_call.1} parent=11 // pred_region
          _
        $region20: #{tpu_custom_call.1} parent=11 // pred_fallthru
          _
        // Predicated region
        $region21: #{tpu_custom_call.1} parent=11 // pred_check
          %p214 = pneg %p104
        $region22: #{tpu_custom_call.1} parent=11 // pred_check_branch
          %216 = sbr.rel (%p214) target = $region24
        $region23: #{tpu_custom_call.1} parent=11 // pred_region
          %s218 = ssub.s32 2048, 2048
          %219 = vsyncadd [#allocation3], %s218
          %s220 = sshll.u32 [#allocation2], 4
          %s221 = int_to_ptr.vmem [resolvable:$true] %s220
          %226 = dma.hbm_to_vmem [thread:$0]  %s3, 2048, %s221, [#allocation3], 128, 128, 8
        $region24: #{tpu_custom_call.1} parent=11 // pred_fallthru
          _
        // Predicated region
        $region25: #{tpu_custom_call.1} parent=11 // pred_check
          %p227 = pneg %p125
        $region26: #{tpu_custom_call.1} parent=11 // pred_check_branch
          %229 = sbr.rel (%p227) target = $region28
        $region27: #{tpu_custom_call.1} parent=11 // pred_region
          _
        $region28: #{tpu_custom_call.1} parent=11 // pred_fallthru
          _
        // Predicated region
        $region29: #{tpu_custom_call.1} parent=11 // pred_check
          %p230 = pneg %p146
        $region30: #{tpu_custom_call.1} parent=11 // pred_check_branch
          %232 = sbr.rel (%p230) target = $region32
        $region31: #{tpu_custom_call.1} parent=11 // pred_region
          %s234 = ssub.s32 2048, 2048
          %235 = vsyncadd [#allocation5], %s234
          %s236 = sshll.u32 [#allocation4], 4
          %s237 = int_to_ptr.vmem [resolvable:$true] %s236
          %242 = dma.hbm_to_vmem [thread:$0]  %s5, 2048, %s237, [#allocation5], 128, 128, 8
        $region32: #{tpu_custom_call.1} parent=11 // pred_fallthru
          _
        // Predicated region
        $region33: #{tpu_custom_call.1} parent=11 // pred_check
          %p243 = pneg %p167
        $region34: #{tpu_custom_call.1} parent=11 // pred_check_branch
          %245 = sbr.rel (%p243) target = $region36
        $region35: #{tpu_custom_call.1} parent=11 // pred_region
          _
        $region36: #{tpu_custom_call.1} parent=11 // pred_fallthru
          _
      $region12: #{tpu_custom_call.1} parent=5 // pred_fallthru
        _
      %p246 = scmp.lt.s32.totalorder %s15, 4
      // Predicated region
      $region37: #{tpu_custom_call.1} parent=5 // pred_check
        %p247 = pneg %p246
      $region38: #{tpu_custom_call.1} parent=5 // pred_check_branch
        %249 = sbr.rel (%p247) target = $region40
      $region39: #{tpu_custom_call.1} parent=5 // pred_region
        // Predicated region
        $region41: #{tpu_custom_call.1} parent=39 // pred_check
          %p250 = pneg %p35
        $region42: #{tpu_custom_call.1} parent=39 // pred_check_branch
          %252 = sbr.rel (%p250) target = $region44
        $region43: #{tpu_custom_call.1} parent=39 // pred_region
          %s253 = smul.u32 2, %s15
          %p254 = scmp.lt.s32.totalorder %s253, 7
          %s255 = scalar_select %p254, %s253, 7
          %s256 = smul.addr %s255, 8
          %s257 = scalar_lea.vmem %s0, %s256
          %s258 = smul.u32 2, %s15
        $region44: #{tpu_custom_call.1} parent=39 // pred_fallthru
          _
      $region40: #{tpu_custom_call.1} parent=5 // pred_fallthru
        _
      %p259 = scmp.le.s32.totalorder 1, %s15
      %p260 = scmp.lt.s32.totalorder %s15, 5
      %p261 = pnand %p259, %p260
      %p262 = pneg %p261
      // Predicated region
      $region45: #{tpu_custom_call.1} parent=5 // pred_check
        _
      $region46: #{tpu_custom_call.1} parent=5 // pred_check_branch
        %264 = sbr.rel (%p261) target = $region48
      $region47: #{tpu_custom_call.1} parent=5 // pred_region
        %s265 = ssub.s32 %s15, 1
        // Predicated region
        $region49: #{tpu_custom_call.1} parent=47 // pred_check
          %p266 = pneg %p104
        $region50: #{tpu_custom_call.1} parent=47 // pred_check_branch
          %268 = sbr.rel (%p266) target = $region52
        $region51: #{tpu_custom_call.1} parent=47 // pred_region
          %269 = dma.done [#allocation3], 2048
        $region52: #{tpu_custom_call.1} parent=47 // pred_fallthru
          _
        // Predicated region
        $region53: #{tpu_custom_call.1} parent=47 // pred_check
          %p270 = pneg %p146
        $region54: #{tpu_custom_call.1} parent=47 // pred_check_branch
          %272 = sbr.rel (%p270) target = $region56
        $region55: #{tpu_custom_call.1} parent=47 // pred_region
          %273 = dma.done [#allocation5], 2048
        $region56: #{tpu_custom_call.1} parent=47 // pred_fallthru
          _
        %s274 = smul.u32 2, %s20
        %p275 = scmp.lt.s32.totalorder %s274, 7
        %s276 = scalar_select %p275, %s274, 7
        %s277 = smul.addr %s276, 8
        %s278 = scalar_lea.vmem %s0, %s277
        %p279 = pneg %p41
        %p280 = pneg %p38
        %p281 = pneg %p62
        %p282 = pneg %p59
        %p283 = pneg %p83
        %p284 = pneg %p80
        %p285 = pneg %p104
        %p286 = pneg %p101
        %p287 = pneg %p125
        %p288 = pneg %p122
        %p289 = pneg %p146
        %p290 = pneg %p143
        %p291 = pneg %p167
        %p292 = pneg %p164
        %p293 = pneg %p193
        %p294 = pneg %p190
        %s295 = smul.u32 2, %s20
        %p296 = scmp.lt.s32.totalorder %s295, 7
        %s297 = scalar_select %p296, %s295, 7
        %s298 = smul.addr %s297, 8
        %s299 = scalar_lea.vmem %s7, %s298
        %s300 = smul.u32 2, %s20
        %p301 = scmp.lt.s32.totalorder %s300, 7
        %s302 = scalar_select %p301, %s300, 7
        %s303 = smul.addr %s302, 8
        %s304 = scalar_lea.vmem %s0, %s303
        %s305 = smul.u32 2, %s20
        %s306 = smul.u32 2, %s20
        %p307 = scmp.lt.s32.totalorder %s306, 7
        %s308 = scalar_select %p307, %s306, 7
        %s309 = smul.addr %s308, 8
        %s310 = scalar_lea.vmem %s7, %s309
        %s311 = smul.u32 2, %s20
        %v312 = vld [vmem:[%s304] sm:$0xff]
        %v313 = vld [vmem:[%s304 + $0x8] sm:$0xff]
        %v314 = vld [vmem:[%s1] sm:$0xff]
        %v315 = vld [vmem:[%s1 + $0x8] sm:$0xff]
        %v316 = vld [vmem:[%s1 + $0x10] sm:$0xff]
        %v317 = vld [vmem:[%s1 + $0x18] sm:$0xff]
        %v318 = vld [vmem:[%s2] sm:$0x1]
        %v320 = vlaneseq
        %v321 = vshrl.u32 %v320, 7
        %v322 = vsub.s32 0, %v321
        %v323 = vrot.slane %v318, %v322
        %vm325 = vcmask 261120
        %v327 = vsel %vm325, %v312, 0
        %v330 = vsel %vm325, %v313, 0
        %332 = vmatprep.subr.mxu0 0.0
        %333 = vmatpush1.msra.mxu0 %v314
        %334 = vmatprep.subr.mxu0 0.0
        %335 = vmatpush1.msra.mxu0 %v315
        %336 = vmatprep.subr.mxu0 0.0
        %337 = vmatpush1.msra.mxu0 %v316
        %338 = vmatprep.subr.mxu0 0.0
        %339 = vmatpush1.msra.mxu0 %v317
        %340 = vmatprep.subr.mxu0 0.0
        %341 = vmatpush1.msra.mxu0 0.0
        %342 = vmatprep.subr.mxu0 0.0
        %343 = vmatpush1.msra.mxu0 0.0
        %344 = vmatprep.subr.mxu0 0.0
        %345 = vmatpush1.msra.mxu0 0.0
        %346 = vmatprep.subr.mxu0 0.0
        %347 = vmatpush1.msra.mxu0 0.0
        %348 = vmatprep.subr.mxu0 0.0
        %349 = vmatpush1.msra.mxu0 0.0
        %350 = vmatprep.subr.mxu0 0.0
        %351 = vmatpush1.msra.mxu0 0.0
        %352 = vmatprep.subr.mxu0 0.0
        %353 = vmatpush1.msra.mxu0 0.0
        %354 = vmatprep.subr.mxu0 0.0
        %355 = vmatpush1.msra.mxu0 0.0
        %356 = vmatprep.subr.mxu0 0.0
        %357 = vmatpush1.msra.mxu0 0.0
        %358 = vmatprep.subr.mxu0 0.0
        %359 = vmatpush1.msra.mxu0 0.0
        %360 = vmatprep.subr.mxu0 0.0
        %361 = vmatpush1.msra.mxu0 0.0
        %362 = vmatprep.subr.mxu0 0.0
        %363 = vmatpush1.msra.mxu0 0.0
        %364 = vmatprep.subr.mxu0 0.0
        %365 = vmatpush1.msra.mxu0 0.0
        %366 = vmatprep.subr.mxu0 0.0
        %367 = vmatpush1.msra.mxu0 0.0
        %368 = vmatprep.subr.mxu0 0.0
        %369 = vmatpush1.msra.mxu0 0.0
        %370 = vmatprep.subr.mxu0 0.0
        %371 = vmatpush1.msra.mxu0 0.0
        %372 = vmatprep.subr.mxu0 0.0
        %373 = vmatpush1.msra.mxu0 0.0
        %374 = vmatprep.subr.mxu0 0.0
        %375 = vmatpush1.msra.mxu0 0.0
        %376 = vmatprep.subr.mxu0 0.0
        %377 = vmatpush1.msra.mxu0 0.0
        %378 = vmatprep.subr.mxu0 0.0
        %379 = vmatpush1.msra.mxu0 0.0
        %380 = vmatprep.subr.mxu0 0.0
        %381 = vmatpush1.msra.mxu0 0.0
        %382 = vmatprep.subr.mxu0 0.0
        %383 = vmatpush1.msra.mxu0 0.0
        %384 = vmatprep.subr.mxu0 0.0
        %385 = vmatpush1.msra.mxu0 0.0
        %386 = vmatprep.subr.mxu0 0.0
        %387 = vmatpush1.msra.mxu0 0.0
        %388 = vmatprep.subr.mxu0 0.0
        %389 = vmatpush1.msra.mxu0 0.0
        %390 = vmatprep.subr.mxu0 0.0
        %391 = vmatpush1.msra.mxu0 0.0
        %392 = vmatprep.subr.mxu0 0.0
        %393 = vmatpush1.msra.mxu0 0.0
        %394 = vmatprep.subr.mxu0 0.0
        %395 = vmatpush1.msra.mxu0 0.0
        %396 = vmatprep.mubr.f32.mxu0 0.0
        %397 = vmatmul.mubr.f32.gmra.mrb[0].mxu0 %v327
        %v398 = vpop.f32.mrb[0].mxu0
        %v399 = vadd.f32 %v323, %v398
        %v400 = vpop.f32.mrb[0].mxu0
        %401 = vmatprep.mubr.f32.mxu0 0.0
        %402 = vmatmul.mubr.f32.gmra.mrb[0].mxu0 %v330
        %v403 = vpop.f32.mrb[0].mxu0
        %v404 = vadd.f32 %v323, %v403
        %v405 = vpop.f32.mrb[0].mxu0
        %406 = vdwg.mxu0
        %v407 = vmax.f32 %v399, 0.0
        %v408 = vmax.f32 %v404, 0.0
        %v409 = vld [vmem:[#allocation2] sm:$0xff]
        %v410 = vld [vmem:[#allocation2 + $0x8] sm:$0xff]
        %v411 = vld [vmem:[#allocation2 + $0x10] sm:$0xff]
        %v412 = vld [vmem:[#allocation2 + $0x18] sm:$0xff]
        %v413 = vld [vmem:[#allocation2 + $0x20] sm:$0xff]
        %v414 = vld [vmem:[#allocation2 + $0x28] sm:$0xff]
        %v415 = vld [vmem:[#allocation2 + $0x30] sm:$0xff]
        %v416 = vld [vmem:[#allocation2 + $0x38] sm:$0xff]
        %v417 = vld [vmem:[#allocation2 + $0x40] sm:$0xff]
        %v418 = vld [vmem:[#allocation2 + $0x48] sm:$0xff]
        %v419 = vld [vmem:[#allocation2 + $0x50] sm:$0xff]
        %v420 = vld [vmem:[#allocation2 + $0x58] sm:$0xff]
        %v421 = vld [vmem:[#allocation2 + $0x60] sm:$0xff]
        %v422 = vld [vmem:[#allocation2 + $0x68] sm:$0xff]
        %v423 = vld [vmem:[#allocation2 + $0x70] sm:$0xff]
        %v424 = vld [vmem:[#allocation2 + $0x78] sm:$0xff]
        %v425 = vld [vmem:[%s4] sm:$0x1]
        %v427 = vlaneseq
        %v428 = vshrl.u32 %v427, 7
        %v429 = vsub.s32 0, %v428
        %v430 = vrot.slane %v425, %v429
        %432 = vmatprep.subr.mxu0 0.0
        %433 = vmatpush1.msra.mxu0 %v409
        %434 = vmatprep.subr.mxu0 0.0
        %435 = vmatpush1.msra.mxu0 %v410
        %436 = vmatprep.subr.mxu0 0.0
        %437 = vmatpush1.msra.mxu0 %v411
        %438 = vmatprep.subr.mxu0 0.0
        %439 = vmatpush1.msra.mxu0 %v412
        %440 = vmatprep.subr.mxu0 0.0
        %441 = vmatpush1.msra.mxu0 %v413
        %442 = vmatprep.subr.mxu0 0.0
        %443 = vmatpush1.msra.mxu0 %v414
        %444 = vmatprep.subr.mxu0 0.0
        %445 = vmatpush1.msra.mxu0 %v415
        %446 = vmatprep.subr.mxu0 0.0
        %447 = vmatpush1.msra.mxu0 %v416
        %448 = vmatprep.subr.mxu0 0.0
        %449 = vmatpush1.msra.mxu0 %v417
        %450 = vmatprep.subr.mxu0 0.0
        %451 = vmatpush1.msra.mxu0 %v418
        %452 = vmatprep.subr.mxu0 0.0
        %453 = vmatpush1.msra.mxu0 %v419
        %454 = vmatprep.subr.mxu0 0.0
        %455 = vmatpush1.msra.mxu0 %v420
        %456 = vmatprep.subr.mxu0 0.0
        %457 = vmatpush1.msra.mxu0 %v421
        %458 = vmatprep.subr.mxu0 0.0
        %459 = vmatpush1.msra.mxu0 %v422
        %460 = vmatprep.subr.mxu0 0.0
        %461 = vmatpush1.msra.mxu0 %v423
        %462 = vmatprep.subr.mxu0 0.0
        %463 = vmatpush1.msra.mxu0 %v424
        %464 = vmatprep.subr.mxu0 0.0
        %465 = vmatpush1.msra.mxu0 0.0
        %466 = vmatprep.subr.mxu0 0.0
        %467 = vmatpush1.msra.mxu0 0.0
        %468 = vmatprep.subr.mxu0 0.0
        %469 = vmatpush1.msra.mxu0 0.0
        %470 = vmatprep.subr.mxu0 0.0
        %471 = vmatpush1.msra.mxu0 0.0
        %472 = vmatprep.subr.mxu0 0.0
        %473 = vmatpush1.msra.mxu0 0.0
        %474 = vmatprep.subr.mxu0 0.0
        %475 = vmatpush1.msra.mxu0 0.0
        %476 = vmatprep.subr.mxu0 0.0
        %477 = vmatpush1.msra.mxu0 0.0
        %478 = vmatprep.subr.mxu0 0.0
        %479 = vmatpush1.msra.mxu0 0.0
        %480 = vmatprep.subr.mxu0 0.0
        %481 = vmatpush1.msra.mxu0 0.0
        %482 = vmatprep.subr.mxu0 0.0
        %483 = vmatpush1.msra.mxu0 0.0
        %484 = vmatprep.subr.mxu0 0.0
        %485 = vmatpush1.msra.mxu0 0.0
        %486 = vmatprep.subr.mxu0 0.0
        %487 = vmatpush1.msra.mxu0 0.0
        %488 = vmatprep.subr.mxu0 0.0
        %489 = vmatpush1.msra.mxu0 0.0
        %490 = vmatprep.subr.mxu0 0.0
        %491 = vmatpush1.msra.mxu0 0.0
        %492 = vmatprep.subr.mxu0 0.0
        %493 = vmatpush1.msra.mxu0 0.0
        %494 = vmatprep.subr.mxu0 0.0
        %495 = vmatpush1.msra.mxu0 0.0
        %496 = vmatprep.mubr.f32.mxu0 0.0
        %497 = vmatmul.mubr.f32.gmra.mrb[0].mxu0 %v407
        %v498 = vpop.f32.mrb[0].mxu0
        %v499 = vadd.f32 %v430, %v498
        %v500 = vpop.f32.mrb[0].mxu0
        %501 = vmatprep.mubr.f32.mxu0 0.0
        %502 = vmatmul.mubr.f32.gmra.mrb[0].mxu0 %v408
        %v503 = vpop.f32.mrb[0].mxu0
        %v504 = vadd.f32 %v430, %v503
        %v505 = vpop.f32.mrb[0].mxu0
        %506 = vdwg.mxu0
        %v507 = vmax.f32 %v499, 0.0
        %v508 = vmax.f32 %v504, 0.0
        %v509 = vld [vmem:[#allocation4] sm:$0xff]
        %v510 = vld [vmem:[#allocation4 + $0x8] sm:$0xff]
        %v511 = vld [vmem:[#allocation4 + $0x10] sm:$0xff]
        %v512 = vld [vmem:[#allocation4 + $0x18] sm:$0xff]
        %v513 = vld [vmem:[#allocation4 + $0x20] sm:$0xff]
        %v514 = vld [vmem:[#allocation4 + $0x28] sm:$0xff]
        %v515 = vld [vmem:[#allocation4 + $0x30] sm:$0xff]
        %v516 = vld [vmem:[#allocation4 + $0x38] sm:$0xff]
        %v517 = vld [vmem:[#allocation4 + $0x40] sm:$0xff]
        %v518 = vld [vmem:[#allocation4 + $0x48] sm:$0xff]
        %v519 = vld [vmem:[#allocation4 + $0x50] sm:$0xff]
        %v520 = vld [vmem:[#allocation4 + $0x58] sm:$0xff]
        %v521 = vld [vmem:[#allocation4 + $0x60] sm:$0xff]
        %v522 = vld [vmem:[#allocation4 + $0x68] sm:$0xff]
        %v523 = vld [vmem:[#allocation4 + $0x70] sm:$0xff]
        %v524 = vld [vmem:[#allocation4 + $0x78] sm:$0xff]
        %v525 = vld [vmem:[%s6] sm:$0x1]
        %v527 = vlaneseq
        %v528 = vshrl.u32 %v527, 7
        %v529 = vsub.s32 0, %v528
        %v530 = vrot.slane %v525, %v529
        %532 = vmatprep.subr.mxu0 0.0
        %533 = vmatpush1.msra.mxu0 %v509
        %534 = vmatprep.subr.mxu0 0.0
        %535 = vmatpush1.msra.mxu0 %v510
        %536 = vmatprep.subr.mxu0 0.0
        %537 = vmatpush1.msra.mxu0 %v511
        %538 = vmatprep.subr.mxu0 0.0
        %539 = vmatpush1.msra.mxu0 %v512
        %540 = vmatprep.subr.mxu0 0.0
        %541 = vmatpush1.msra.mxu0 %v513
        %542 = vmatprep.subr.mxu0 0.0
        %543 = vmatpush1.msra.mxu0 %v514
        %544 = vmatprep.subr.mxu0 0.0
        %545 = vmatpush1.msra.mxu0 %v515
        %546 = vmatprep.subr.mxu0 0.0
        %547 = vmatpush1.msra.mxu0 %v516
        %548 = vmatprep.subr.mxu0 0.0
        %549 = vmatpush1.msra.mxu0 %v517
        %550 = vmatprep.subr.mxu0 0.0
        %551 = vmatpush1.msra.mxu0 %v518
        %552 = vmatprep.subr.mxu0 0.0
        %553 = vmatpush1.msra.mxu0 %v519
        %554 = vmatprep.subr.mxu0 0.0
        %555 = vmatpush1.msra.mxu0 %v520
        %556 = vmatprep.subr.mxu0 0.0
        %557 = vmatpush1.msra.mxu0 %v521
        %558 = vmatprep.subr.mxu0 0.0
        %559 = vmatpush1.msra.mxu0 %v522
        %560 = vmatprep.subr.mxu0 0.0
        %561 = vmatpush1.msra.mxu0 %v523
        %562 = vmatprep.subr.mxu0 0.0
        %563 = vmatpush1.msra.mxu0 %v524
        %564 = vmatprep.subr.mxu0 0.0
        %565 = vmatpush1.msra.mxu0 0.0
        %566 = vmatprep.subr.mxu0 0.0
        %567 = vmatpush1.msra.mxu0 0.0
        %568 = vmatprep.subr.mxu0 0.0
        %569 = vmatpush1.msra.mxu0 0.0
        %570 = vmatprep.subr.mxu0 0.0
        %571 = vmatpush1.msra.mxu0 0.0
        %572 = vmatprep.subr.mxu0 0.0
        %573 = vmatpush1.msra.mxu0 0.0
        %574 = vmatprep.subr.mxu0 0.0
        %575 = vmatpush1.msra.mxu0 0.0
        %576 = vmatprep.subr.mxu0 0.0
        %577 = vmatpush1.msra.mxu0 0.0
        %578 = vmatprep.subr.mxu0 0.0
        %579 = vmatpush1.msra.mxu0 0.0
        %580 = vmatprep.subr.mxu0 0.0
        %581 = vmatpush1.msra.mxu0 0.0
        %582 = vmatprep.subr.mxu0 0.0
        %583 = vmatpush1.msra.mxu0 0.0
        %584 = vmatprep.subr.mxu0 0.0
        %585 = vmatpush1.msra.mxu0 0.0
        %586 = vmatprep.subr.mxu0 0.0
        %587 = vmatpush1.msra.mxu0 0.0
        %588 = vmatprep.subr.mxu0 0.0
        %589 = vmatpush1.msra.mxu0 0.0
        %590 = vmatprep.subr.mxu0 0.0
        %591 = vmatpush1.msra.mxu0 0.0
        %592 = vmatprep.subr.mxu0 0.0
        %593 = vmatpush1.msra.mxu0 0.0
        %594 = vmatprep.subr.mxu0 0.0
        %595 = vmatpush1.msra.mxu0 0.0
        %596 = vmatprep.mubr.f32.mxu0 0.0
        %597 = vmatmul.mubr.f32.gmra.mrb[0].mxu0 %v507
        %v598 = vpop.f32.mrb[0].mxu0
        %v599 = vadd.f32 %v530, %v598
        %v600 = vpop.f32.mrb[0].mxu0
        %601 = vmatprep.mubr.f32.mxu0 0.0
        %602 = vmatmul.mubr.f32.gmra.mrb[0].mxu0 %v508
        %v603 = vpop.f32.mrb[0].mxu0
        %v604 = vadd.f32 %v530, %v603
        %v605 = vpop.f32.mrb[0].mxu0
        %606 = vdwg.mxu0
        %vm607 = vcmask 64512
        %608 = vst.msk [vmem:[%s310] sm:$0xff] %vm607, %v599
        %609 = vst.msk [vmem:[%s310 + $0x8] sm:$0xff] %vm607, %v604
        %s610 = smul.u32 2, %s20
        %p611 = scmp.lt.s32.totalorder %s610, 7
        %s612 = scalar_select %p611, %s610, 7
        %s613 = smul.addr %s612, 8
        %s614 = scalar_lea.vmem %s7, %s613
        // Predicated region
        $region57: #{tpu_custom_call.1} parent=47 // pred_check
          %p615 = pneg %p190
        $region58: #{tpu_custom_call.1} parent=47 // pred_check_branch
          %617 = sbr.rel (%p615) target = $region60
        $region59: #{tpu_custom_call.1} parent=47 // pred_region
          %s618 = smul.u32 2, %s20
        $region60: #{tpu_custom_call.1} parent=47 // pred_fallthru
          _
      $region48: #{tpu_custom_call.1} parent=5 // pred_fallthru
        _
      %p619 = scmp.le.s32.totalorder 2, %s15
      // Predicated region
      $region61: #{tpu_custom_call.1} parent=5 // pred_check
        %p620 = pneg %p619
      $region62: #{tpu_custom_call.1} parent=5 // pred_check_branch
        %622 = sbr.rel (%p620) target = $region64
      $region63: #{tpu_custom_call.1} parent=5 // pred_region
        %s623 = ssub.s32 %s15, 2
        // Predicated region
        $region65: #{tpu_custom_call.1} parent=63 // pred_check
          %p624 = pneg %p196
        $region66: #{tpu_custom_call.1} parent=63 // pred_check_branch
          %626 = sbr.rel (%p624) target = $region68
        $region67: #{tpu_custom_call.1} parent=63 // pred_region
          %s627 = smul.u32 2, %s21
          %p628 = scmp.lt.s32.totalorder %s627, 7
          %s629 = scalar_select %p628, %s627, 7
          %s630 = smul.addr %s629, 8
          %s631 = scalar_lea.vmem %s7, %s630
        $region68: #{tpu_custom_call.1} parent=63 // pred_fallthru
          _
      $region64: #{tpu_custom_call.1} parent=5 // pred_fallthru
        _
    $region6: #{tpu_custom_call.1} parent=1 // loop_footer
      %s19 = sadd.s32 1, %s15
    $region7: #{tpu_custom_call.1} parent=1 // loop_footer_branch
      %14 = sbr.rel target = $region3
    $region8: #{tpu_custom_call.1} parent=1 // loop_exit
      _
    %632 = vsyncpa [#allocation3], 1
    %s633 = scalar_lea.sflag [#allocation3], 1
    %634 = vsyncpa %s633, 1
    %635 = vsyncpa [#allocation5], 1

</llo_original>
